<compile_context>
chip_gen: v7x
topology: tpu7x:2x2x1
jax: 0.10.0
libtpu: 0.0.40
codegen_flags: <defaults>
</compile_context>

<pallas_src>
import functools

import jax
import jax.numpy as jnp
import numpy as np
from jax.experimental import pallas as pl
from jax.experimental.pallas import tpu as pltpu

_EPS = 1e-5
_LANE = 128


def _round_up(v, m):
    return (v + m - 1) // m * m


# --------------------------------------------------------------------------------
# kernels
# --------------------------------------------------------------------------------
def _accum_finalize_stats(h, bn_ref, stats_ref, inv_m):
    """Accumulate sum / sum-of-squares of h (rows 0/1 of stats_ref); at the last row
    tile fold gamma/beta into (scale, shift) = (g*rsqrt(var+eps), b - mu*scale)."""
    t = pl.program_id(0)

    @pl.when(t == 0)
    def _():
        stats_ref[...] = jnp.zeros_like(stats_ref)

    stats_ref[0:1, :] += jnp.sum(h, axis=0, keepdims=True)
    stats_ref[1:2, :] += jnp.sum(h * h, axis=0, keepdims=True)

    @pl.when(t == pl.num_programs(0) - 1)
    def _():
        g = bn_ref[0:1, :]
        b = bn_ref[1:2, :]
        mu = stats_ref[0:1, :] * inv_m
        var = jnp.maximum(stats_ref[1:2, :] * inv_m - mu * mu, 0.0)
        scale = g * jax.lax.rsqrt(var + _EPS)
        stats_ref[0:1, :] = scale
        stats_ref[1:2, :] = b - mu * scale


def _bn_relu(h_ref, stats_ref):
    # folded BN affine (scale/shift precomputed by the producing call) + ReLU
    return jnp.maximum(h_ref[...] * stats_ref[0:1, :] + stats_ref[1:2, :], 0.0)


def stage0_kernel(x_ref, w1_ref, bn1_ref, h1_ref, stats1_ref, *, m_total):
    # conv1 (k=1) and BN1 statistics; stash pre-BN h1.
    h1 = jnp.dot(x_ref[...].astype(jnp.bfloat16), w1_ref[...],
                 preferred_element_type=jnp.float32)
    h1_ref[...] = h1
    _accum_finalize_stats(h1, bn1_ref, stats1_ref, 1.0 / m_total)


def stage1_kernel(h1_ref, stats1_ref, w2f_ref, bn2_ref, h2_ref, stats2_ref,
                  *, seq_len, m_total):
    # BN1+ReLU, conv2 (k=3,p=1) via one wide MXU matmul + sublane rolls; BN2 stats.
    tile_m = h1_ref.shape[0]
    cmid_pad = h1_ref.shape[1]
    a1 = _bn_relu(h1_ref, stats1_ref)
    a = jnp.dot(a1.astype(jnp.bfloat16), w2f_ref[...],
                preferred_element_type=jnp.float32)
    # in-sequence position of each row (tiles hold whole sequences): narrow column
    pos = jax.lax.broadcasted_iota(jnp.int32, (tile_m, 1), 0) % seq_len
    prev = jnp.where(pos >= 1,
                     pltpu.roll(a[:, 0:cmid_pad], shift=1, axis=0), 0.0)
    nxt = jnp.where(pos <= seq_len - 2,
                    pltpu.roll(a[:, 2 * cmid_pad:3 * cmid_pad],
                               shift=tile_m - 1, axis=0), 0.0)
    h2 = prev + a[:, cmid_pad:2 * cmid_pad] + nxt
    h2_ref[...] = h2
    _accum_finalize_stats(h2, bn2_ref, stats2_ref, 1.0 / m_total)


def stage2_kernel(h2_ref, stats2_ref, w3_ref, bn3_ref, h3_ref, stats3_ref, *, m_total):
    # BN2+ReLU, conv3 (k=1); BN3 stats; stash pre-BN h3.
    a2 = _bn_relu(h2_ref, stats2_ref)
    h3 = jnp.dot(a2.astype(jnp.bfloat16), w3_ref[...],
                 preferred_element_type=jnp.float32)
    h3_ref[...] = h3
    _accum_finalize_stats(h3, bn3_ref, stats3_ref, 1.0 / m_total)


def stage3_kernel(h3_ref, stats3_ref, x_ref, out_ref):
    # BN3 + residual add + ReLU only (no recompute); fully parallel over row tiles.
    h3 = h3_ref[...] * stats3_ref[0:1, :] + stats3_ref[1:2, :]
    out_ref[...] = jnp.maximum(h3 + x_ref[...], 0.0).astype(out_ref.dtype)


# --------------------------------------------------------------------------------
# wrapper
# --------------------------------------------------------------------------------
def residual_block_forward(x_ncl, w1_t, w2_t, w3_t, g1, b1, g2, b2, g3, b3,
                           *, vmem_budget_bytes=24 * 1024 * 1024,
                           vmem_limit_bytes=48 * 1024 * 1024):
    """x_ncl: (N, C_in, L) f32 (PyTorch NCL); conv weights in PyTorch (out, in, k)."""
    n, cin, seq_len = x_ncl.shape
    cmid = w1_t.shape[0]
    cout = w3_t.shape[0]
    assert cout == cin, "residual add requires in_channels == 4*intermediate_channels"

    cin_pad = _round_up(cin, _LANE)
    cmid_pad = _round_up(cmid, _LANE)
    cout_pad = _round_up(cout, _LANE)          # == cin_pad
    m_total = n * seq_len

    # ---- layout glue (outside the kernels) -----------------------------------
    # activations: NCL -> (N*L, Cin), zero-pad channels to lane width
    x2d = jnp.transpose(x_ncl, (0, 2, 1)).reshape(m_total, cin)
    x2d = jnp.pad(x2d, ((0, 0), (0, cin_pad - cin)))

    # weights: channels-last matmul layouts, zero-padded, bf16 for the MXU
    w1 = jnp.zeros((cin_pad, cmid_pad), jnp.float32).at[:cin, :cmid].set(w1_t[:, :, 0].T)
    w3 = jnp.zeros((cmid_pad, cout_pad), jnp.float32).at[:cmid, :cout].set(w3_t[:, :, 0].T)
    w2f = jnp.concatenate(
        [jnp.zeros((cmid_pad, cmid_pad), jnp.float32).at[:cmid, :cmid].set(w2_t[:, :, k].T)
         for k in range(3)], axis=1)           # fused taps: (Cmid_pad, 3*Cmid_pad)
    w1, w2f, w3 = (w.astype(jnp.bfloat16) for w in (w1, w2f, w3))

    # per-layer BN affine pack: (8, Cpad) rows [gamma, beta, 0...]; padded lanes get
    # gamma=beta=0 so padded channels stay identically zero through the whole chain.
    def _bn_pack(g, b, cpad):
        p = jnp.zeros((8, cpad), jnp.float32)
        return p.at[0, :g.shape[0]].set(g).at[1, :b.shape[0]].set(b)
    bn1 = _bn_pack(g1, b1, cmid_pad)
    bn2 = _bn_pack(g2, b2, cmid_pad)
    bn3 = _bn_pack(g3, b3, cout_pad)

    # ---- row tiling: whole sequences per tile ---------------------------------
    # worst-case per-row working set (f32 bytes): double-buffered in/out tiles plus
    # the (tile_m, 3*Cmid) conv2 intermediate and temporaries.
    bytes_per_row = 4 * (2 * cin_pad + 8 * cmid_pad + 6 * cout_pad)
    seqs_budget = max(1, vmem_budget_bytes // max(1, seq_len * bytes_per_row))
    seqs = n                                    # fallback: one tile = whole slab
    for cand in range(min(n, seqs_budget), 0, -1):
        if n % cand == 0 and (cand * seq_len) % 8 == 0:
            seqs = cand
            break
    tile_m = seqs * seq_len
    num_tiles = m_total // tile_m

    cparams_seq = pltpu.CompilerParams(dimension_semantics=("arbitrary",),
                                       vmem_limit_bytes=vmem_limit_bytes)
    cparams_par = pltpu.CompilerParams(dimension_semantics=("parallel",),
                                       vmem_limit_bytes=vmem_limit_bytes)

    def row_spec(c):
        return pl.BlockSpec((tile_m, c), lambda t: (t, 0))

    def full_spec(shape):
        return pl.BlockSpec(shape, lambda t: (0, 0))

    # ---- call 1: conv1 + BN1 stats --------------------------------------------
    h1, stats1 = pl.pallas_call(
        functools.partial(stage0_kernel, m_total=m_total),
        out_shape=(jax.ShapeDtypeStruct((m_total, cmid_pad), jnp.float32),
                   jax.ShapeDtypeStruct((8, cmid_pad), jnp.float32)),
        grid_spec=pltpu.PrefetchScalarGridSpec(
            num_scalar_prefetch=0, grid=(num_tiles,),
            in_specs=[row_spec(cin_pad),
                      full_spec((cin_pad, cmid_pad)),
                      full_spec((8, cmid_pad))],
            out_specs=[row_spec(cmid_pad), full_spec((8, cmid_pad))]),
        compiler_params=cparams_seq,
    )(x2d, w1, bn1)

    # ---- call 2: BN1+ReLU, conv2 + BN2 stats -----------------------------------
    h2, stats2 = pl.pallas_call(
        functools.partial(stage1_kernel, seq_len=seq_len, m_total=m_total),
        out_shape=(jax.ShapeDtypeStruct((m_total, cmid_pad), jnp.float32),
                   jax.ShapeDtypeStruct((8, cmid_pad), jnp.float32)),
        grid_spec=pltpu.PrefetchScalarGridSpec(
            num_scalar_prefetch=0, grid=(num_tiles,),
            in_specs=[row_spec(cmid_pad),
                      full_spec((8, cmid_pad)),
                      full_spec((cmid_pad, 3 * cmid_pad)),
                      full_spec((8, cmid_pad))],
            out_specs=[row_spec(cmid_pad), full_spec((8, cmid_pad))]),
        compiler_params=cparams_seq,
    )(h1, stats1, w2f, bn2)

    # ---- call 3: BN2+ReLU, conv3 + BN3 stats -----------------------------------
    h3, stats3 = pl.pallas_call(
        functools.partial(stage2_kernel, m_total=m_total),
        out_shape=(jax.ShapeDtypeStruct((m_total, cout_pad), jnp.float32),
                   jax.ShapeDtypeStruct((8, cout_pad), jnp.float32)),
        grid_spec=pltpu.PrefetchScalarGridSpec(
            num_scalar_prefetch=0, grid=(num_tiles,),
            in_specs=[row_spec(cmid_pad),
                      full_spec((8, cmid_pad)),
                      full_spec((cmid_pad, cout_pad)),
                      full_spec((8, cout_pad))],
            out_specs=[row_spec(cout_pad), full_spec((8, cout_pad))]),
        compiler_params=cparams_seq,
    )(h2, stats2, w3, bn3)

    # ---- call 4: BN3 + residual add + ReLU (no matmul, fully parallel) --------
    out2d = pl.pallas_call(
        stage3_kernel,
        out_shape=jax.ShapeDtypeStruct((m_total, cout_pad), jnp.float32),
        grid_spec=pltpu.PrefetchScalarGridSpec(
            num_scalar_prefetch=0, grid=(num_tiles,),
            in_specs=[row_spec(cout_pad),
                      full_spec((8, cout_pad)),
                      row_spec(cout_pad)],
            out_specs=row_spec(cout_pad)),
        compiler_params=cparams_par,
    )(h3, stats3, x2d)

    # glue: strip channel padding, (N*L, C) -> NCL
    return out2d[:, :cout].reshape(n, seq_len, cout).transpose(0, 2, 1)


# --------------------------------------------------------------------------------
# pure-JAX reference (mirrors the PyTorch forward, training-mode BN)
# --------------------------------------------------------------------------------
def reference_forward(x_ncl, w1_t, w2_t, w3_t, g1, b1, g2, b2, g3, b3,
                      *, matmul_dtype=jnp.float32):
    precision = (jax.lax.Precision.HIGHEST if matmul_dtype == jnp.float32
                 else jax.lax.Precision.DEFAULT)

    def mm(w_oc, y):
        return jnp.einsum('oc,ncl->nol', w_oc.astype(matmul_dtype),
                          y.astype(matmul_dtype), precision=precision,
                          preferred_element_type=jnp.float32)

    def bn(y, g, b):
        mu = jnp.mean(y, axis=(0, 2), keepdims=True)
        var = jnp.mean((y - mu) ** 2, axis=(0, 2), keepdims=True)
        return (y - mu) * jax.lax.rsqrt(var + _EPS) * g[None, :, None] + b[None, :, None]

    L = x_ncl.shape[2]
    y = jnp.maximum(bn(mm(w1_t[:, :, 0], x_ncl), g1, b1), 0.0)
    yp = jnp.pad(y, ((0, 0), (0, 0), (1, 1)))
    y = sum(mm(w2_t[:, :, k], yp[:, :, k:k + L]) for k in range(3))
    y = jnp.maximum(bn(y, g2, b2), 0.0)
    y = bn(mm(w3_t[:, :, 0], y), g3, b3)
    return jnp.maximum(y + x_ncl, 0.0)


if __name__ == "__main__":
    key = jax.random.PRNGKey(0)
    batch, seq_len = 2, 16
    intermediate_channels = 4
    expansion = 4
    in_channels = intermediate_channels * expansion   # 16 -> residual add is shape-valid
    cmid, cout = intermediate_channels, intermediate_channels * expansion

    ks = jax.random.split(key, 10)
    x = jax.random.normal(ks[0], (batch, in_channels, seq_len), jnp.float32)
    # PyTorch-layout conv weights (out_ch, in_ch, k), bias=False
    w1_t = jax.random.normal(ks[1], (cmid, in_channels, 1), jnp.float32) * 0.2
    w2_t = jax.random.normal(ks[2], (cmid, cmid, 3), jnp.float32) * 0.2
    w3_t = jax.random.normal(ks[3], (cout, cmid, 1), jnp.float32) * 0.2
    # BatchNorm affine params (perturbed from defaults so the affine path is exercised)
    g1 = 1.0 + 0.1 * jax.random.normal(ks[4], (cmid,), jnp.float32)
    b1 = 0.1 * jax.random.normal(ks[5], (cmid,), jnp.float32)
    g2 = 1.0 + 0.1 * jax.random.normal(ks[6], (cmid,), jnp.float32)
    b2 = 0.1 * jax.random.normal(ks[7], (cmid,), jnp.float32)
    g3 = 1.0 + 0.1 * jax.random.normal(ks[8], (cout,), jnp.float32)
    b3 = 0.1 * jax.random.normal(ks[9], (cout,), jnp.float32)

    out = jax.block_until_ready(
        residual_block_forward(x, w1_t, w2_t, w3_t, g1, b1, g2, b2, g3, b3))
    assert out.shape == (batch, in_channels, seq_len)

    # precision-matched reference (bf16 MXU inputs) -> tight tolerance
    ref_bf16 = jax.block_until_ready(reference_forward(
        x, w1_t, w2_t, w3_t, g1, b1, g2, b2, g3, b3, matmul_dtype=jnp.bfloat16))
    np.testing.assert_allclose(np.asarray(out), np.asarray(ref_bf16),
                               rtol=1e-2, atol=1e-2)

    # full-f32 reference -> loose tolerance (kernel uses bf16 MXU inputs)
    ref_f32 = jax.block_until_ready(reference_forward(
        x, w1_t, w2_t, w3_t, g1, b1, g2, b2, g3, b3, matmul_dtype=jnp.float32))
    np.testing.assert_allclose(np.asarray(out), np.asarray(ref_f32),
                               rtol=5e-2, atol=5e-2)

    print("KERNEL_OK")
</pallas_src>

<mosaic_0001>
module attributes {stable_mosaic.version = 11 : i64} {
  func.func @stage0_kernel(%arg0: i32, %arg1: memref<32x128xf32, #tpu.memory_space<vmem>>, %arg2: memref<128x128xbf16, #tpu.memory_space<vmem>>, %arg3: memref<8x128xf32, #tpu.memory_space<vmem>>, %arg4: memref<32x128xf32, #tpu.memory_space<vmem>>, %arg5: memref<8x128xf32, #tpu.memory_space<vmem>>) attributes {dimension_semantics = [#tpu.dimension_semantics<arbitrary>], iteration_bounds = array<i64: 1>, scalar_prefetch = 0 : i64, scratch_operands = 0 : i64, tpu.core_type = #tpu.core_type<tc>, window_params = [{transform_indices = @transform_0, window_bounds = array<i64: 32, 128>}, {pipeline_mode = #tpu.pipeline_mode<synchronous>, transform_indices = @transform_1, window_bounds = array<i64: 128, 128>}, {pipeline_mode = #tpu.pipeline_mode<synchronous>, transform_indices = @transform_2, window_bounds = array<i64: 8, 128>}, {transform_indices = @transform_3, window_bounds = array<i64: 32, 128>}, {pipeline_mode = #tpu.pipeline_mode<synchronous>, transform_indices = @transform_4, window_bounds = array<i64: 8, 128>}]} {
    %c0 = arith.constant 0 : index
    %c0_0 = arith.constant 0 : index
    %0 = vector.load %arg1[%c0, %c0_0] : memref<32x128xf32, #tpu.memory_space<vmem>>, vector<32x128xf32>
    %1 = arith.truncf %0 : vector<32x128xf32> to vector<32x128xbf16>
    %c0_1 = arith.constant 0 : index
    %c0_2 = arith.constant 0 : index
    %2 = vector.load %arg2[%c0_1, %c0_2] : memref<128x128xbf16, #tpu.memory_space<vmem>>, vector<128x128xbf16>
    %cst = arith.constant dense<0.000000e+00> : vector<32x128xf32>
    %3 = tpu.matmul %1, %2, %cst {dimension_numbers = #tpu.dot_dimension_numbers<[1], [0], [0], [1], [0, 0, 1, 1], [], []>} : vector<32x128xbf16>, vector<128x128xbf16>, vector<32x128xf32> -> vector<32x128xf32>
    %c0_3 = arith.constant 0 : index
    %c0_4 = arith.constant 0 : index
    %4 = vector.load %arg4[%c0_3, %c0_4] : memref<32x128xf32, #tpu.memory_space<vmem>>, vector<32x128xf32>
    tpu.vector_store %arg4[%c0_3, %c0_4], %3 {strides = array<i32>} : memref<32x128xf32, #tpu.memory_space<vmem>>, vector<32x128xf32>,
    %c0_i32 = arith.constant 0 : i32
    %5 = arith.cmpi eq, %arg0, %c0_i32 : i32
    %6 = arith.extui %5 : i1 to i32
    %c0_i32_5 = arith.constant 0 : i32
    %7 = arith.cmpi ne, %6, %c0_i32_5 : i32
    scf.if %7 {
      %cst_17 = arith.constant 0.000000e+00 : f32
      %22 = vector.broadcast %cst_17 : f32 to vector<8x128xf32>
      %c0_18 = arith.constant 0 : index
      %c0_19 = arith.constant 0 : index
      %23 = vector.load %arg5[%c0_18, %c0_19] : memref<8x128xf32, #tpu.memory_space<vmem>>, vector<8x128xf32>
      tpu.vector_store %arg5[%c0_18, %c0_19], %22 {strides = array<i32>} : memref<8x128xf32, #tpu.memory_space<vmem>>, vector<8x128xf32>,
    } else {
    }
    %c0_6 = arith.constant 0 : index
    %c0_7 = arith.constant 0 : index
    %8 = vector.load %arg5[%c0_6, %c0_7] : memref<8x128xf32, #tpu.memory_space<vmem>>, vector<1x128xf32>
    %cst_8 = arith.constant dense<0.000000e+00> : vector<128xf32>
    %9 = vector.multi_reduction <add>, %3, %cst_8 [0] : vector<32x128xf32> to vector<128xf32>
    %10 = vector.shape_cast %9 : vector<128xf32> to vector<1x128xf32>
    %11 = arith.addf %8, %10 : vector<1x128xf32>
    %c0_9 = arith.constant 0 : index
    %c0_10 = arith.constant 0 : index
    %12 = vector.load %arg5[%c0_9, %c0_10] : memref<8x128xf32, #tpu.memory_space<vmem>>, vector<1x128xf32>
    tpu.vector_store %arg5[%c0_9, %c0_10], %11 {strides = array<i32>} : memref<8x128xf32, #tpu.memory_space<vmem>>, vector<1x128xf32>,
    %c1 = arith.constant 1 : index
    %c0_11 = arith.constant 0 : index
    %13 = vector.load %arg5[%c1, %c0_11] : memref<8x128xf32, #tpu.memory_space<vmem>>, vector<1x128xf32>
    %14 = arith.mulf %3, %3 : vector<32x128xf32>
    %cst_12 = arith.constant dense<0.000000e+00> : vector<128xf32>
    %15 = vector.multi_reduction <add>, %14, %cst_12 [0] : vector<32x128xf32> to vector<128xf32>
    %16 = vector.shape_cast %15 : vector<128xf32> to vector<1x128xf32>
    %17 = arith.addf %13, %16 : vector<1x128xf32>
    %c1_13 = arith.constant 1 : index
    %c0_14 = arith.constant 0 : index
    %18 = vector.load %arg5[%c1_13, %c0_14] : memref<8x128xf32, #tpu.memory_space<vmem>>, vector<1x128xf32>
    tpu.vector_store %arg5[%c1_13, %c0_14], %17 {strides = array<i32>} : memref<8x128xf32, #tpu.memory_space<vmem>>, vector<1x128xf32>,
    %c0_i32_15 = arith.constant 0 : i32
    %19 = arith.cmpi eq, %arg0, %c0_i32_15 : i32
    %20 = arith.extui %19 : i1 to i32
    %c0_i32_16 = arith.constant 0 : i32
    %21 = arith.cmpi ne, %20, %c0_i32_16 : i32
    scf.if %21 {
      %c0_17 = arith.constant 0 : index
      %c0_18 = arith.constant 0 : index
      %22 = vector.load %arg3[%c0_17, %c0_18] : memref<8x128xf32, #tpu.memory_space<vmem>>, vector<1x128xf32>
      %c1_19 = arith.constant 1 : index
      %c0_20 = arith.constant 0 : index
      %23 = vector.load %arg3[%c1_19, %c0_20] : memref<8x128xf32, #tpu.memory_space<vmem>>, vector<1x128xf32>
      %c0_21 = arith.constant 0 : index
      %c0_22 = arith.constant 0 : index
      %24 = vector.load %arg5[%c0_21, %c0_22] : memref<8x128xf32, #tpu.memory_space<vmem>>, vector<1x128xf32>
      %cst_23 = arith.constant 3.125000e-02 : f32
      %25 = vector.broadcast %cst_23 : f32 to vector<1x128xf32>
      %26 = arith.mulf %24, %25 : vector<1x128xf32>
      %c1_24 = arith.constant 1 : index
      %c0_25 = arith.constant 0 : index
      %27 = vector.load %arg5[%c1_24, %c0_25] : memref<8x128xf32, #tpu.memory_space<vmem>>, vector<1x128xf32>
      %cst_26 = arith.constant 3.125000e-02 : f32
      %28 = vector.broadcast %cst_26 : f32 to vector<1x128xf32>
      %29 = arith.mulf %27, %28 : vector<1x128xf32>
      %30 = arith.mulf %26, %26 : vector<1x128xf32>
      %31 = arith.subf %29, %30 : vector<1x128xf32>
      %cst_27 = arith.constant 0.000000e+00 : f32
      %32 = vector.broadcast %cst_27 : f32 to vector<1x128xf32>
      %33 = arith.maximumf %31, %32 : vector<1x128xf32>
      %cst_28 = arith.constant 9.99999974E-6 : f32
      %34 = vector.broadcast %cst_28 : f32 to vector<1x128xf32>
      %35 = arith.addf %33, %34 : vector<1x128xf32>
      %36 = math.rsqrt %35 : vector<1x128xf32>
      %37 = arith.mulf %22, %36 : vector<1x128xf32>
      %c0_29 = arith.constant 0 : index
      %c0_30 = arith.constant 0 : index
      %38 = vector.load %arg5[%c0_29, %c0_30] : memref<8x128xf32, #tpu.memory_space<vmem>>, vector<1x128xf32>
      tpu.vector_store %arg5[%c0_29, %c0_30], %37 {strides = array<i32>} : memref<8x128xf32, #tpu.memory_space<vmem>>, vector<1x128xf32>,
      %39 = arith.mulf %26, %37 : vector<1x128xf32>
      %40 = arith.subf %23, %39 : vector<1x128xf32>
      %c1_31 = arith.constant 1 : index
      %c0_32 = arith.constant 0 : index
      %41 = vector.load %arg5[%c1_31, %c0_32] : memref<8x128xf32, #tpu.memory_space<vmem>>, vector<1x128xf32>
      tpu.vector_store %arg5[%c1_31, %c0_32], %40 {strides = array<i32>} : memref<8x128xf32, #tpu.memory_space<vmem>>, vector<1x128xf32>,
    } else {
    }
    return
  }
  func.func @transform_0(%arg0: i32) -> (i32, i32) {
    %c0_i32 = arith.constant 0 : i32
    %c0_i32_0 = arith.constant 0 : i32
    return %arg0, %c0_i32 : i32, i32
  }
  func.func @transform_1(%arg0: i32) -> (i32, i32) {
    %c0_i32 = arith.constant 0 : i32
    %c0_i32_0 = arith.constant 0 : i32
    %c0_i32_1 = arith.constant 0 : i32
    return %c0_i32, %c0_i32_0 : i32, i32
  }
  func.func @transform_2(%arg0: i32) -> (i32, i32) {
    %c0_i32 = arith.constant 0 : i32
    %c0_i32_0 = arith.constant 0 : i32
    %c0_i32_1 = arith.constant 0 : i32
    return %c0_i32, %c0_i32_0 : i32, i32
  }
  func.func @transform_3(%arg0: i32) -> (i32, i32) {
    %c0_i32 = arith.constant 0 : i32
    %c0_i32_0 = arith.constant 0 : i32
    return %arg0, %c0_i32 : i32, i32
  }
  func.func @transform_4(%arg0: i32) -> (i32, i32) {
    %c0_i32 = arith.constant 0 : i32
    %c0_i32_0 = arith.constant 0 : i32
    %c0_i32_1 = arith.constant 0 : i32
    return %c0_i32, %c0_i32_0 : i32, i32
  }
}

</mosaic_0001>

<llo_original>
// kernel: tpu_custom_call.1
$region0: #{tpu_custom_call.1}
  #allocation0 [shape = 'u32[]', space=smem, size = 0x4, offset = 0x4, fixed_abs, tag = 'smem constant byte address 0x4 - core index']
  #allocation1 [shape = 'u32[144,128]{1,0:T(1,128)}', space=vmem, size = 0x12000, scoped, tag = 'internal scratch']
  %s0 = inlined_call_operand.hbm [shape: f32[32,128], index: 0, kind: input, shape index: {}]
  %s1 = inlined_call_operand.hbm [shape: bf16[128,128], index: 1, kind: input, shape index: {}]
  %s2 = inlined_call_operand.hbm [shape: f32[8,128], index: 2, kind: input, shape index: {}]
  %s3 = inlined_call_operand.hbm [shape: f32[32,128], index: 3, kind: output, shape index: {0}]
  %s4 = inlined_call_operand.hbm [shape: f32[8,128], index: 4, kind: output, shape index: {1}]
  %5 = xla_tuple %s3, %s4
  %s6 = sld [smem:[#allocation0]]
  $region50: #{tpu_custom_call.1} parent=0
    _
  %s8 = ssub.s32 1, %s6
  %s9 = scalar_select 0, %s8, %s6
  $region1: #{tpu_custom_call.1} parent=0
    #allocation2 [shape = 'u8[16384]{0}', space=vmem, size = 0x4000, scoped, tag = 'input window, operand 0, single buffered']
    #allocation3 [shape = 's32[1]{0}', space=sflag, size = 0x4, scoped, tag = 'scoped memory for tpu_custom_call.1']
    #allocation4 [shape = 's32[1]{0}', space=sflag, size = 0x4, scoped, tag = 'scoped memory for tpu_custom_call.1']
    #allocation5 [shape = 'u8[32768]{0}', space=vmem, size = 0x8000, scoped, tag = 'input window, operand 1, single buffered']
    #allocation6 [shape = 's32[1]{0}', space=sflag, size = 0x4, scoped, tag = 'scoped memory for tpu_custom_call.1']
    #allocation7 [shape = 'u8[4096]{0}', space=vmem, size = 0x1000, scoped, tag = 'input window, operand 2, single buffered']
    #allocation8 [shape = 'u8[16384]{0}', space=vmem, size = 0x4000, scoped, tag = 'output window, operand 0, single buffered']
    #allocation9 [shape = 'u8[4096]{0}', space=vmem, size = 0x1000, scoped, tag = 'output window, operand 1, single buffered']
    #allocation10 [shape = 's32[1]{0}', space=sflag, size = 0x4, scoped, tag = 'scoped memory for tpu_custom_call.1']
    %10 = vsyncpa [#allocation3], 0
    %11 = vsyncpa [#allocation6], 0
    %12 = vsyncpa [#allocation4], 0
    %13 = vsyncpa [#allocation10], 0
    // Predicated region
    $region2: #{tpu_custom_call.1} parent=1 // pred_check
      _
    $region3: #{tpu_custom_call.1} parent=1 // pred_check_branch
      %15 = sbr.rel (0) target = $region5
    $region4: #{tpu_custom_call.1} parent=1 // pred_region
      %s17 = ssub.s32 512, 512
      %18 = vsyncadd [#allocation3], %s17
      %s19 = sshll.u32 [#allocation2], 4
      %s20 = int_to_ptr.vmem [resolvable:$true] %s19
      %25 = dma.hbm_to_vmem [thread:$0]  %s0, 512, %s20, [#allocation3], 128, 128, 8
    $region5: #{tpu_custom_call.1} parent=1 // pred_fallthru
      _
    // Predicated region
    $region6: #{tpu_custom_call.1} parent=1 // pred_check
      _
    $region7: #{tpu_custom_call.1} parent=1 // pred_check_branch
      %27 = sbr.rel (0) target = $region9
    $region8: #{tpu_custom_call.1} parent=1 // pred_region
      %s29 = ssub.s32 1024, 1024
      %30 = vsyncadd [#allocation6], %s29
      %s31 = sshll.u32 [#allocation5], 4
      %s32 = int_to_ptr.vmem [resolvable:$true] %s31
      %37 = dma.hbm_to_vmem [thread:$0]  %s1, 1024, %s32, [#allocation6], 64, 64, 4
    $region9: #{tpu_custom_call.1} parent=1 // pred_fallthru
      _
    // Predicated region
    $region10: #{tpu_custom_call.1} parent=1 // pred_check
      _
    $region11: #{tpu_custom_call.1} parent=1 // pred_check_branch
      %39 = sbr.rel (0) target = $region13
    $region12: #{tpu_custom_call.1} parent=1 // pred_region
      %s41 = ssub.s32 128, 128
      %42 = vsyncadd [#allocation6], %s41
      %s44 = sshll.u32 [#allocation7], 4
      %s45 = int_to_ptr.vmem [resolvable:$true] %s44
      %47 = dma.hbm_to_vmem [thread:$0]  %s2, 128, %s45, [#allocation6]
    $region13: #{tpu_custom_call.1} parent=1 // pred_fallthru
      _
    // Predicated region
    $region14: #{tpu_custom_call.1} parent=1 // pred_check
      _
    $region15: #{tpu_custom_call.1} parent=1 // pred_check_branch
      %49 = sbr.rel (0) target = $region17
    $region16: #{tpu_custom_call.1} parent=1 // pred_region
      %50 = dma.done [#allocation3], 512
    $region17: #{tpu_custom_call.1} parent=1 // pred_fallthru
      _
    // Predicated region
    $region18: #{tpu_custom_call.1} parent=1 // pred_check
      _
    $region19: #{tpu_custom_call.1} parent=1 // pred_check_branch
      %52 = sbr.rel (0) target = $region21
    $region20: #{tpu_custom_call.1} parent=1 // pred_region
      %53 = dma.done [#allocation6], 1024
    $region21: #{tpu_custom_call.1} parent=1 // pred_fallthru
      _
    // Predicated region
    $region22: #{tpu_custom_call.1} parent=1 // pred_check
      _
    $region23: #{tpu_custom_call.1} parent=1 // pred_check_branch
      %55 = sbr.rel (0) target = $region25
    $region24: #{tpu_custom_call.1} parent=1 // pred_region
      %56 = dma.done [#allocation6], 128
    $region25: #{tpu_custom_call.1} parent=1 // pred_fallthru
      _
    %v58 = vld [vmem:[#allocation2] sm:$0xff]
    %v59 = vld [vmem:[#allocation2 + $0x8] sm:$0xff]
    %v60 = vld [vmem:[#allocation2 + $0x10] sm:$0xff]
    %v61 = vld [vmem:[#allocation2 + $0x18] sm:$0xff]
    %v62 = vpack.c.bf16 %v59, %v58
    %v63 = vpack.c.bf16 %v61, %v60
    %v64 = vld [vmem:[#allocation5] sm:$0xf]
    %v65 = vld [vmem:[#allocation5 + $0x4] sm:$0xf]
    %v66 = vld [vmem:[#allocation5 + $0x8] sm:$0xf]
    %v67 = vld [vmem:[#allocation5 + $0xc] sm:$0xf]
    %v68 = vld [vmem:[#allocation5 + $0x10] sm:$0xf]
    %v69 = vld [vmem:[#allocation5 + $0x14] sm:$0xf]
    %v70 = vld [vmem:[#allocation5 + $0x18] sm:$0xf]
    %v71 = vld [vmem:[#allocation5 + $0x1c] sm:$0xf]
    %v72 = vld [vmem:[#allocation5 + $0x20] sm:$0xf]
    %v73 = vld [vmem:[#allocation5 + $0x24] sm:$0xf]
    %v74 = vld [vmem:[#allocation5 + $0x28] sm:$0xf]
    %v75 = vld [vmem:[#allocation5 + $0x2c] sm:$0xf]
    %v76 = vld [vmem:[#allocation5 + $0x30] sm:$0xf]
    %v77 = vld [vmem:[#allocation5 + $0x34] sm:$0xf]
    %v78 = vld [vmem:[#allocation5 + $0x38] sm:$0xf]
    %v79 = vld [vmem:[#allocation5 + $0x3c] sm:$0xf]
    %v96 = vunpack.c.l.b16 %v64
    %v97 = vunpack.c.l.b16 %v65
    %v98 = vunpack.c.l.b16 %v66
    %v99 = vunpack.c.l.b16 %v67
    %v100 = vunpack.c.l.b16 %v68
    %v101 = vunpack.c.l.b16 %v69
    %v102 = vunpack.c.l.b16 %v70
    %v103 = vunpack.c.l.b16 %v71
    %v104 = vunpack.c.l.b16 %v72
    %v105 = vunpack.c.l.b16 %v73
    %v106 = vunpack.c.l.b16 %v74
    %v107 = vunpack.c.l.b16 %v75
    %v108 = vunpack.c.l.b16 %v76
    %v109 = vunpack.c.l.b16 %v77
    %v110 = vunpack.c.l.b16 %v78
    %v111 = vunpack.c.l.b16 %v79
    %v112 = vpack.c.b16 %v97, %v96
    %v113 = vpack.c.b16 %v99, %v98
    %v114 = vpack.c.b16 %v101, %v100
    %v115 = vpack.c.b16 %v103, %v102
    %v116 = vpack.c.b16 %v105, %v104
    %v117 = vpack.c.b16 %v107, %v106
    %v118 = vpack.c.b16 %v109, %v108
    %v119 = vpack.c.b16 %v111, %v110
    %128 = vmatprep.subr.bf16.mxu0 0
    %129 = vmatpush1.bf16.msra.mxu0 %v112
    %130 = vmatprep.subr.bf16.mxu0 0
    %131 = vmatpush1.bf16.msra.mxu0 %v113
    %132 = vmatprep.subr.bf16.mxu0 0
    %133 = vmatpush1.bf16.msra.mxu0 %v114
    %134 = vmatprep.subr.bf16.mxu0 0
    %135 = vmatpush1.bf16.msra.mxu0 %v115
    %136 = vmatprep.subr.bf16.mxu0 0
    %137 = vmatpush1.bf16.msra.mxu0 %v116
    %138 = vmatprep.subr.bf16.mxu0 0
    %139 = vmatpush1.bf16.msra.mxu0 %v117
    %140 = vmatprep.subr.bf16.mxu0 0
    %141 = vmatpush1.bf16.msra.mxu0 %v118
    %142 = vmatprep.subr.bf16.mxu0 0
    %143 = vmatpush1.bf16.msra.mxu0 %v119
    %144 = vmatprep.subr.bf16.mxu0 0
    %145 = vmatpush1.bf16.msra.mxu0 0
    %146 = vmatprep.subr.bf16.mxu0 0
    %147 = vmatpush1.bf16.msra.mxu0 0
    %148 = vmatprep.subr.bf16.mxu0 0
    %149 = vmatpush1.bf16.msra.mxu0 0
    %150 = vmatprep.subr.bf16.mxu0 0
    %151 = vmatpush1.bf16.msra.mxu0 0
    %152 = vmatprep.subr.bf16.mxu0 0
    %153 = vmatpush1.bf16.msra.mxu0 0
    %154 = vmatprep.subr.bf16.mxu0 0
    %155 = vmatpush1.bf16.msra.mxu0 0
    %156 = vmatprep.subr.bf16.mxu0 0
    %157 = vmatpush1.bf16.msra.mxu0 0
    %158 = vmatprep.subr.bf16.mxu0 0
    %159 = vmatpush1.bf16.msra.mxu0 0
    %160 = vmatprep.mubr.bf16.mxu0 0
    %161 = vmatmul.mubr.bf16.gmra.mrb[0].mxu0 %v62
    %v162 = vpop.f32.mrb[0].mxu0
    %v163 = vadd.f32 0.0, %v162
    %v164 = vpop.f32.mrb[0].mxu0
    %v165 = vpop.f32.mrb[0].mxu0
    %v166 = vadd.f32 0.0, %v165
    %v167 = vpop.f32.mrb[0].mxu0
    %168 = vmatprep.mubr.bf16.mxu0 0
    %169 = vmatmul.mubr.bf16.gmra.mrb[0].mxu0 %v63
    %v170 = vpop.f32.mrb[0].mxu0
    %v171 = vadd.f32 0.0, %v170
    %v172 = vpop.f32.mrb[0].mxu0
    %v173 = vpop.f32.mrb[0].mxu0
    %v174 = vadd.f32 0.0, %v173
    %v175 = vpop.f32.mrb[0].mxu0
    %176 = vdwg.mxu0
    %177 = vst [vmem:[#allocation8] sm:$0xff] %v163
    %178 = vst [vmem:[#allocation8 + $0x8] sm:$0xff] %v166
    %179 = vst [vmem:[#allocation8 + $0x10] sm:$0xff] %v171
    %180 = vst [vmem:[#allocation8 + $0x18] sm:$0xff] %v174
    %p181 = scmp.eq.s32.totalorder 0, 0
    // Predicated region
    $region26: #{tpu_custom_call.1} parent=1 // pred_check
      %p182 = pneg %p181
    $region27: #{tpu_custom_call.1} parent=1 // pred_check_branch
      %184 = sbr.rel (%p182) target = $region29
    $region28: #{tpu_custom_call.1} parent=1 // pred_region
      %185 = vst [vmem:[#allocation9] sm:$0xff] 0.0
    $region29: #{tpu_custom_call.1} parent=1 // pred_fallthru
      _
    %v186 = vld [vmem:[#allocation9] sm:$0x1]
    %v187 = vadd.f32 %v163, %v166
    %v188 = vadd.f32 %v187, %v171
    %v189 = vadd.f32 %v188, %v174
    %v190 = vrot.slane %v189, 4
    %v191 = vadd.f32 %v189, %v190
    %v192 = vrot.slane %v191, 2
    %v193 = vadd.f32 %v191, %v192
    %v194 = vrot.slane %v193, 1
    %v195 = vadd.f32 %v193, %v194
    %v196 = vadd.f32 %v186, %v195
    %197 = vst [vmem:[#allocation9] sm:$0x1] %v196
    %v198 = vld [vmem:[#allocation9 + $0x1] sm:$0x1]
    %v199 = vmul.f32 %v163, %v163
    %v200 = vmul.f32 %v166, %v166
    %v201 = vmul.f32 %v171, %v171
    %v202 = vmul.f32 %v174, %v174
    %v203 = vadd.f32 %v199, %v200
    %v204 = vadd.f32 %v203, %v201
    %v205 = vadd.f32 %v204, %v202
    %v206 = vrot.slane %v205, 4
    %v207 = vadd.f32 %v205, %v206
    %v208 = vrot.slane %v207, 2
    %v209 = vadd.f32 %v207, %v208
    %v210 = vrot.slane %v209, 1
    %v211 = vadd.f32 %v209, %v210
    %v212 = vadd.f32 %v198, %v211
    %213 = vst [vmem:[#allocation9 + $0x1] sm:$0x1] %v212
    // Predicated region
    $region30: #{tpu_custom_call.1} parent=1 // pred_check
      %p214 = pneg %p181
    $region31: #{tpu_custom_call.1} parent=1 // pred_check_branch
      %216 = sbr.rel (%p214) target = $region33
    $region32: #{tpu_custom_call.1} parent=1 // pred_region
      %v217 = vld [vmem:[#allocation7] sm:$0x1]
      %v218 = vld [vmem:[#allocation7 + $0x1] sm:$0x1]
      %v219 = vld [vmem:[#allocation9] sm:$0x1]
      %v220 = vmul.f32 %v219, 0.03125
      %v221 = vld [vmem:[#allocation9 + $0x1] sm:$0x1]
      %v222 = vmul.f32 %v221, 0.03125
      %v223 = vmul.f32 %v220, %v220
      %v224 = vsub.f32 %v222, %v223
      %v225 = vmax.f32 %v224, 0.0
      %v226 = vadd.f32 %v225, 1e-05
      %v227 = vrsqrt.pop %v226
      %v228 = vmul.f32 %v217, %v227
      %229 = vst [vmem:[#allocation9] sm:$0x1] %v228
      %v230 = vmul.f32 %v220, %v228
      %v231 = vsub.f32 %v218, %v230
      %232 = vst [vmem:[#allocation9 + $0x1] sm:$0x1] %v231
    $region33: #{tpu_custom_call.1} parent=1 // pred_fallthru
      _
    // Predicated region
    $region34: #{tpu_custom_call.1} parent=1 // pred_check
      _
    $region35: #{tpu_custom_call.1} parent=1 // pred_check_branch
      %234 = sbr.rel (0) target = $region37
    $region36: #{tpu_custom_call.1} parent=1 // pred_region
      %s236 = ssub.s32 512, 512
      %237 = vsyncadd [#allocation4], %s236
      %s238 = sshll.u32 [#allocation8], 4
      %s239 = int_to_ptr.vmem [resolvable:$true] %s238
      %244 = dma.vmem_to_hbm [thread:$0]  %s239, 512, %s3, [#allocation4], 128, 128, 8
    $region37: #{tpu_custom_call.1} parent=1 // pred_fallthru
      _
    // Predicated region
    $region38: #{tpu_custom_call.1} parent=1 // pred_check
      _
    $region39: #{tpu_custom_call.1} parent=1 // pred_check_branch
      %246 = sbr.rel (0) target = $region41
    $region40: #{tpu_custom_call.1} parent=1 // pred_region
      %s248 = ssub.s32 128, 128
      %249 = vsyncadd [#allocation10], %s248
      %s251 = sshll.u32 [#allocation9], 4
      %s252 = int_to_ptr.vmem [resolvable:$true] %s251
      %254 = dma.vmem_to_hbm [thread:$0]  %s252, 128, %s4, [#allocation10]
    $region41: #{tpu_custom_call.1} parent=1 // pred_fallthru
      _
    // Predicated region
    $region42: #{tpu_custom_call.1} parent=1 // pred_check
      _
    $region43: #{tpu_custom_call.1} parent=1 // pred_check_branch
      %256 = sbr.rel (0) target = $region45
    $region44: #{tpu_custom_call.1} parent=1 // pred_region
      %257 = dma.done [#allocation4], 512
    $region45: #{tpu_custom_call.1} parent=1 // pred_fallthru
      _
    // Predicated region
    $region46: #{tpu_custom_call.1} parent=1 // pred_check
      _
    $region47: #{tpu_custom_call.1} parent=1 // pred_check_branch
      %259 = sbr.rel (0) target = $region49
    $region48: #{tpu_custom_call.1} parent=1 // pred_region
      %260 = dma.done [#allocation10], 128
    $region49: #{tpu_custom_call.1} parent=1 // pred_fallthru
      _
    %261 = vsyncpa [#allocation3], 1
    %262 = vsyncpa [#allocation6], 1
    %263 = vsyncpa [#allocation4], 1
    %264 = vsyncpa [#allocation10], 1

</llo_original>
